<compile_context>
chip_gen: v7x
topology: tpu7x:2x2x1
jax: 0.10.0
libtpu: 0.0.40
codegen_flags: <defaults>
</compile_context>

<pallas_src>
import functools

import jax
import jax.numpy as jnp
from jax.experimental import pallas as pl
from jax.experimental.pallas import tpu as pltpu


# ----------------------------------------------------------------------------
# Kernel body
# ----------------------------------------------------------------------------
def _linear_kernel(x_ref, w_ref, o_ref, acc_ref):
    # x_ref: [tm, tk] bf16  (batch tile, in-feature tile)
    # w_ref: [tn, tk] bf16  (out-feature tile, in-feature tile) -- nn.Linear layout
    # o_ref: [tm, tn] f32
    # acc_ref: [tm, tn] f32 accumulator, resident across the K grid axis.
    k = pl.program_id(2)

    @pl.when(k == 0)
    def _():
        acc_ref[...] = jnp.zeros_like(acc_ref)

    # Contract x axis 1 with W axis 1  ==  x @ W.T; transpose folded into the MXU.
    acc_ref[...] += jax.lax.dot_general(
        x_ref[...],
        w_ref[...],
        dimension_numbers=(((1,), (1,)), ((), ())),
        preferred_element_type=jnp.float32,
    )

    @pl.when(k == pl.num_programs(2) - 1)
    def _():
        o_ref[...] = acc_ref[...].astype(o_ref.dtype)


# ----------------------------------------------------------------------------
# Generation-aware sizing helpers
# ----------------------------------------------------------------------------
_VMEM_CAP_CACHE = None


def _vmem_capacity_bytes():
    """Physical VMEM per TensorCore; conservative 64 MiB (v7x) fallback."""
    global _VMEM_CAP_CACHE
    if _VMEM_CAP_CACHE is None:
        try:
            _VMEM_CAP_CACHE = int(pltpu.get_tpu_info().vmem_capacity_bytes)
        except Exception:
            _VMEM_CAP_CACHE = 64 * 1024 * 1024
    return _VMEM_CAP_CACHE


def _default_tile_targets():
    cap = _vmem_capacity_bytes()
    if cap >= 96 * 1024 * 1024:
        # v5e / v6e: 128 MiB physical VMEM -> big tiles, pure bandwidth savings.
        return 1024, 1024, 1024
    # v7x: 64 MiB physical per TC -> keep the double-buffered footprint small.
    return 512, 512, 1024


def _tile_and_pad(dim, target):
    """Return (tile, pad). dim <= target -> full-extent block (no pad);
    otherwise tile = target and dim is padded up to the next tile multiple."""
    if dim <= target:
        return dim, 0
    n_blocks = -(-dim // target)
    return target, n_blocks * target - dim


# ----------------------------------------------------------------------------
# Wrapper
# ----------------------------------------------------------------------------
@functools.partial(jax.jit, static_argnames=("tm_target", "tn_target", "tk_target"))
def _forward_impl(x, weight, *, tm_target, tn_target, tk_target):
    B, d_in = x.shape
    d_out, d_in_w = weight.shape
    assert d_in == d_in_w, "weight in-features must match x features"

    tm, pad_m = _tile_and_pad(B, tm_target)
    tn, pad_n = _tile_and_pad(d_out, tn_target)
    tk, pad_k = _tile_and_pad(d_in, tk_target)

    pm, pn, pk = B + pad_m, d_out + pad_n, d_in + pad_k

    # Megacore (v7x): make sure at least one "parallel" grid axis has extent >= 2
    # when the padded N extent allows it.
    if (pm // tm) == 1 and (pn // tn) == 1 and tn >= 512 and tn % 512 == 0 \
            and pn % (tn // 2) == 0:
        tn //= 2

    grid_m, grid_n, grid_k = pm // tm, pn // tn, pk // tk
    grid = (grid_m, grid_n, grid_k)

    # bf16 operands (cast once here; zero-padding contributes zero to the dot).
    xb = x.astype(jnp.bfloat16)
    wb = weight.astype(jnp.bfloat16)
    if pad_m or pad_k:
        xb = jnp.pad(xb, ((0, pad_m), (0, pad_k)))
    if pad_n or pad_k:
        wb = jnp.pad(wb, ((0, pad_n), (0, pad_k)))

    # Actual double-buffered VMEM footprint: bf16 x/W tiles, f32 out tile, f32 acc.
    footprint = (2 * tm * tk * 2) + (2 * tn * tk * 2) + (2 * tm * tn * 4) + (tm * tn * 4)
    vmem_cap = _vmem_capacity_bytes()
    vmem_limit = int(min(max(footprint + 8 * 1024 * 1024, 16 * 1024 * 1024), vmem_cap))
    vmem_limit = max(vmem_limit, footprint)  # never declare less than we use

    # Real traffic including tile re-reads (bf16 inputs, f32 output).
    cost = pl.CostEstimate(
        flops=2 * pm * pk * pn,
        transcendentals=0,
        bytes_accessed=2 * pm * pk * grid_n + 2 * pn * pk * grid_m + 4 * pm * pn,
    )

    y = pl.pallas_call(
        _linear_kernel,
        out_shape=jax.ShapeDtypeStruct((pm, pn), jnp.float32),
        grid_spec=pltpu.PrefetchScalarGridSpec(
            num_scalar_prefetch=0,
            grid=grid,
            in_specs=[
                pl.BlockSpec((tm, tk), lambda i, j, k: (i, k)),
                pl.BlockSpec((tn, tk), lambda i, j, k: (j, k)),
            ],
            out_specs=pl.BlockSpec((tm, tn), lambda i, j, k: (i, j)),
            scratch_shapes=[pltpu.VMEM((tm, tn), jnp.float32)],
        ),
        compiler_params=pltpu.CompilerParams(
            dimension_semantics=("parallel", "parallel", "arbitrary"),
            vmem_limit_bytes=vmem_limit,
        ),
        cost_estimate=cost,
    )(xb, wb)

    if pad_m or pad_n:
        y = y[:B, :d_out]
    return y


def linear_unsigned_forward(x, weight, *, tm_target=None, tn_target=None, tk_target=None):
    """x: [B, d_in], weight: [d_out, d_in] (nn.Linear layout, untransposed)."""
    dm, dn, dk = _default_tile_targets()
    return _forward_impl(
        x, weight,
        tm_target=int(tm_target or dm),
        tn_target=int(tn_target or dn),
        tk_target=int(tk_target or dk),
    )


# ----------------------------------------------------------------------------
# Demo / correctness check
# ----------------------------------------------------------------------------
if __name__ == "__main__":
    # TODO(synk): at these demo sizes (B=8, d=32) a standalone Pallas call is
    # dominated by launch/grid-step overhead; the tiling/padding logic above
    # only pays off at production sizes (B, d >= 512).
    d = 32
    B = 8

    key = jax.random.PRNGKey(0)
    kx, kw = jax.random.split(key)

    # Deterministic parameter init (shape matches nn.Linear(d, d, bias=False).weight).
    bound = 1.0 / jnp.sqrt(d)
    weight = jax.random.uniform(kw, (d, d), jnp.float32, minval=-bound, maxval=bound)
    # self.w (the [2*d*d] doubled-variable parameter) is not used in forward;
    # it only appears in adj()/losses, so it is not part of the kernel.
    x = jax.random.normal(kx, (B, d), jnp.float32)

    y = jax.block_until_ready(linear_unsigned_forward(x, weight))

    # Reference: the same bf16-operand / f32-accumulate computation the MXU does.
    xr = x.astype(jnp.bfloat16).astype(jnp.float32)
    wr = weight.astype(jnp.bfloat16).astype(jnp.float32)
    y_ref = xr @ wr.T
    assert jnp.allclose(y, y_ref, atol=1e-4, rtol=1e-4), "mismatch vs reference (small)"

    # Exercise the tiled + padded path with non-divisible shapes and small tiles.
    k2, k3 = jax.random.split(kw)
    x2 = jax.random.normal(k2, (300, 200), jnp.float32)
    w2 = jax.random.uniform(k3, (200, 200), jnp.float32, minval=-0.1, maxval=0.1)
    y2 = jax.block_until_ready(
        linear_unsigned_forward(x2, w2, tm_target=128, tn_target=128, tk_target=128)
    )
    y2_ref = (x2.astype(jnp.bfloat16).astype(jnp.float32)
              @ w2.astype(jnp.bfloat16).astype(jnp.float32).T)
    assert jnp.allclose(y2, y2_ref, atol=1e-3, rtol=1e-3), "mismatch vs reference (padded)"

    print("KERNEL_OK")
</pallas_src>

<mosaic_0001>
module attributes {stable_mosaic.version = 11 : i64} {
  func.func @_linear_kernel(%arg0: i32, %arg1: i32, %arg2: i32, %arg3: memref<8x32xbf16, #tpu.memory_space<vmem>>, %arg4: memref<32x32xbf16, #tpu.memory_space<vmem>>, %arg5: memref<8x32xf32, #tpu.memory_space<vmem>>, %arg6: memref<8x32xf32, #tpu.memory_space<vmem>>) attributes {dimension_semantics = [#tpu.dimension_semantics<parallel>, #tpu.dimension_semantics<parallel>, #tpu.dimension_semantics<arbitrary>], iteration_bounds = array<i64: 1, 1, 1>, scalar_prefetch = 0 : i64, scratch_operands = 1 : i64, tpu.core_type = #tpu.core_type<tc>, window_params = [{transform_indices = @transform_0, window_bounds = array<i64: 8, 32>}, {transform_indices = @transform_1, window_bounds = array<i64: 32, 32>}, {transform_indices = @transform_2, window_bounds = array<i64: 8, 32>}]} {
    %c0_i32 = arith.constant 0 : i32
    %0 = arith.cmpi eq, %arg2, %c0_i32 : i32
    %1 = arith.extui %0 : i1 to i32
    %c0_i32_0 = arith.constant 0 : i32
    %2 = arith.cmpi ne, %1, %c0_i32_0 : i32
    scf.if %2 {
      %cst_10 = arith.constant 0.000000e+00 : f32
      %12 = vector.broadcast %cst_10 : f32 to vector<8x32xf32>
      %c0_11 = arith.constant 0 : index
      %c0_12 = arith.constant 0 : index
      %13 = vector.load %arg6[%c0_11, %c0_12] : memref<8x32xf32, #tpu.memory_space<vmem>>, vector<8x32xf32>
      tpu.vector_store %arg6[%c0_11, %c0_12], %12 {strides = array<i32>} : memref<8x32xf32, #tpu.memory_space<vmem>>, vector<8x32xf32>,
    } else {
    }
    %c0 = arith.constant 0 : index
    %c0_1 = arith.constant 0 : index
    %3 = vector.load %arg6[%c0, %c0_1] : memref<8x32xf32, #tpu.memory_space<vmem>>, vector<8x32xf32>
    %c0_2 = arith.constant 0 : index
    %c0_3 = arith.constant 0 : index
    %4 = vector.load %arg3[%c0_2, %c0_3] : memref<8x32xbf16, #tpu.memory_space<vmem>>, vector<8x32xbf16>
    %c0_4 = arith.constant 0 : index
    %c0_5 = arith.constant 0 : index
    %5 = vector.load %arg4[%c0_4, %c0_5] : memref<32x32xbf16, #tpu.memory_space<vmem>>, vector<32x32xbf16>
    %cst = arith.constant dense<0.000000e+00> : vector<8x32xf32>
    %6 = tpu.matmul %4, %5, %cst {dimension_numbers = #tpu.dot_dimension_numbers<[1], [1], [0], [0], [0, 0, 1, 0], [], []>} : vector<8x32xbf16>, vector<32x32xbf16>, vector<8x32xf32> -> vector<8x32xf32>
    %7 = arith.addf %3, %6 : vector<8x32xf32>
    %c0_6 = arith.constant 0 : index
    %c0_7 = arith.constant 0 : index
    %8 = vector.load %arg6[%c0_6, %c0_7] : memref<8x32xf32, #tpu.memory_space<vmem>>, vector<8x32xf32>
    tpu.vector_store %arg6[%c0_6, %c0_7], %7 {strides = array<i32>} : memref<8x32xf32, #tpu.memory_space<vmem>>, vector<8x32xf32>,
    %c0_i32_8 = arith.constant 0 : i32
    %9 = arith.cmpi eq, %arg2, %c0_i32_8 : i32
    %10 = arith.extui %9 : i1 to i32
    %c0_i32_9 = arith.constant 0 : i32
    %11 = arith.cmpi ne, %10, %c0_i32_9 : i32
    scf.if %11 {
      %c0_10 = arith.constant 0 : index
      %c0_11 = arith.constant 0 : index
      %12 = vector.load %arg6[%c0_10, %c0_11] : memref<8x32xf32, #tpu.memory_space<vmem>>, vector<8x32xf32>
      %c0_12 = arith.constant 0 : index
      %c0_13 = arith.constant 0 : index
      %13 = vector.load %arg5[%c0_12, %c0_13] : memref<8x32xf32, #tpu.memory_space<vmem>>, vector<8x32xf32>
      tpu.vector_store %arg5[%c0_12, %c0_13], %12 {strides = array<i32>} : memref<8x32xf32, #tpu.memory_space<vmem>>, vector<8x32xf32>,
    } else {
    }
    return
  }
  func.func @transform_0(%arg0: i32, %arg1: i32, %arg2: i32) -> (i32, i32) {
    %c0_i32 = arith.constant 0 : i32
    return %arg0, %arg2 : i32, i32
  }
  func.func @transform_1(%arg0: i32, %arg1: i32, %arg2: i32) -> (i32, i32) {
    %c0_i32 = arith.constant 0 : i32
    return %arg1, %arg2 : i32, i32
  }
  func.func @transform_2(%arg0: i32, %arg1: i32, %arg2: i32) -> (i32, i32) {
    %c0_i32 = arith.constant 0 : i32
    return %arg0, %arg1 : i32, i32
  }
}

</mosaic_0001>

<llo_original>
// kernel: _forward_impl.1
$region0: #{_forward_impl.1}
  #allocation0 [shape = 'u32[]', space=smem, size = 0x4, offset = 0x4, fixed_abs, tag = 'smem constant byte address 0x4 - core index']
  #allocation1 [shape = 'u32[144,128]{1,0:T(1,128)}', space=vmem, size = 0x12000, scoped, tag = 'internal scratch']
  #allocation2 [shape = 'f32[8,32]{1,0:T(8,128)}', space=vmem, size = 0x1000, scoped, tag = 'scratch operand']
  %s0 = inlined_call_operand.vmem [shape: bf16[8,32], index: 0, kind: input, shape index: {}]
  %s1 = inlined_call_operand.vmem [shape: bf16[32,32], index: 1, kind: input, shape index: {}]
  %s2 = inlined_call_operand.hbm [shape: f32[8,32], index: 2, kind: output, shape index: {}]
  %s3 = sld [smem:[#allocation0]]
  $region26: #{_forward_impl.1} parent=0
    _
  %s5 = ssub.s32 1, %s3
  %s6 = scalar_select 0, %s5, %s3
  $region1: #{_forward_impl.1} parent=0
    #allocation3 [shape = 'u8[4096]{0}', space=vmem, size = 0x1000, scoped, tag = 'output window, operand 0, single buffered']
    #allocation4 [shape = 's32[1]{0}', space=sflag, size = 0x4, scoped, tag = 'scoped memory for _forward_impl.1']
    %7 = vsyncpa [#allocation4], 0
    // Predicated region
    $region2: #{_forward_impl.1} parent=1 // pred_check
      _
    $region3: #{_forward_impl.1} parent=1 // pred_check_branch
      %9 = sbr.rel (0) target = $region5
    $region4: #{_forward_impl.1} parent=1 // pred_region
      _
    $region5: #{_forward_impl.1} parent=1 // pred_fallthru
      _
    // Predicated region
    $region6: #{_forward_impl.1} parent=1 // pred_check
      _
    $region7: #{_forward_impl.1} parent=1 // pred_check_branch
      %11 = sbr.rel (0) target = $region9
    $region8: #{_forward_impl.1} parent=1 // pred_region
      _
    $region9: #{_forward_impl.1} parent=1 // pred_fallthru
      _
    %p13 = scmp.eq.s32.totalorder 0, 0
    // Predicated region
    $region10: #{_forward_impl.1} parent=1 // pred_check
      %p14 = pneg %p13
    $region11: #{_forward_impl.1} parent=1 // pred_check_branch
      %16 = sbr.rel (%p14) target = $region13
    $region12: #{_forward_impl.1} parent=1 // pred_region
      %vm17 = vcmask 261120
      %18 = vst.msk [vmem:[#allocation2] sm:$0xff] %vm17, 0.0
    $region13: #{_forward_impl.1} parent=1 // pred_fallthru
      _
    %v19 = vld [vmem:[#allocation2] sm:$0xff]
    %v20 = vld [vmem:[%s0] sm:$0xf]
    %v21 = vld [vmem:[%s1] sm:$0xf]
    %v22 = vld [vmem:[%s1 + $0x4] sm:$0xf]
    %v23 = vld [vmem:[%s1 + $0x8] sm:$0xf]
    %v24 = vld [vmem:[%s1 + $0xc] sm:$0xf]
    %v29 = vunpack.c.l.b16 %v21
    %v30 = vunpack.c.l.b16 %v22
    %v31 = vunpack.c.l.b16 %v23
    %v32 = vunpack.c.l.b16 %v24
    %v33 = vpack.c.b16 %v30, %v29
    %v34 = vpack.c.b16 %v32, %v31
    %vm35 = vcmask 261120
    %v37 = vsel %vm35, %v20, 0
    %v40 = vsel %vm35, %v33, 0
    %v43 = vsel %vm35, %v34, 0
    %45 = vmatprep.subr.bf16.mxu0 0
    %46 = vmatpush1.bf16.xpose.msra.mxu0 %v40
    %47 = vmatprep.subr.bf16.mxu0 0
    %48 = vmatpush1.bf16.xpose.msra.mxu0 %v43
    %49 = vmatprep.subr.bf16.mxu0 0
    %50 = vmatpush1.bf16.xpose.msra.mxu0 0
    %51 = vmatprep.subr.bf16.mxu0 0
    %52 = vmatpush1.bf16.xpose.msra.mxu0 0
    %53 = vmatprep.subr.bf16.mxu0 0
    %54 = vmatpush1.bf16.xpose.msra.mxu0 0
    %55 = vmatprep.subr.bf16.mxu0 0
    %56 = vmatpush1.bf16.xpose.msra.mxu0 0
    %57 = vmatprep.subr.bf16.mxu0 0
    %58 = vmatpush1.bf16.xpose.msra.mxu0 0
    %59 = vmatprep.subr.bf16.mxu0 0
    %60 = vmatpush1.bf16.xpose.msra.mxu0 0
    %61 = vmatprep.subr.bf16.mxu0 0
    %62 = vmatpush1.bf16.xpose.msra.mxu0 0
    %63 = vmatprep.subr.bf16.mxu0 0
    %64 = vmatpush1.bf16.xpose.msra.mxu0 0
    %65 = vmatprep.subr.bf16.mxu0 0
    %66 = vmatpush1.bf16.xpose.msra.mxu0 0
    %67 = vmatprep.subr.bf16.mxu0 0
    %68 = vmatpush1.bf16.xpose.msra.mxu0 0
    %69 = vmatprep.subr.bf16.mxu0 0
    %70 = vmatpush1.bf16.xpose.msra.mxu0 0
    %71 = vmatprep.subr.bf16.mxu0 0
    %72 = vmatpush1.bf16.xpose.msra.mxu0 0
    %73 = vmatprep.subr.bf16.mxu0 0
    %74 = vmatpush1.bf16.xpose.msra.mxu0 0
    %75 = vmatprep.subr.bf16.mxu0 0
    %76 = vmatpush1.bf16.xpose.msra.mxu0 0
    %77 = vmatprep.mubr.bf16.mxu0 0
    %78 = vmatmul.mubr.bf16.gmra.mrb[0].mxu0 %v37
    %v79 = vpop.f32.mrb[0].mxu0
    %v80 = vadd.f32 0.0, %v79
    %v81 = vpop.f32.mrb[0].mxu0
    %v82 = vpop.f32.mrb[0].mxu0
    %v83 = vpop.f32.mrb[0].mxu0
    %84 = vdwg.mxu0
    %v85 = vadd.f32 %v19, %v80
    %86 = vst.msk [vmem:[#allocation2] sm:$0xff] %vm35, %v85
    // Predicated region
    $region14: #{_forward_impl.1} parent=1 // pred_check
      %p87 = pneg %p13
    $region15: #{_forward_impl.1} parent=1 // pred_check_branch
      %89 = sbr.rel (%p87) target = $region17
    $region16: #{_forward_impl.1} parent=1 // pred_region
      %v90 = vld [vmem:[#allocation2] sm:$0xff]
      %91 = vst.msk [vmem:[#allocation3] sm:$0xff] %vm35, %v90
    $region17: #{_forward_impl.1} parent=1 // pred_fallthru
      _
    // Predicated region
    $region18: #{_forward_impl.1} parent=1 // pred_check
      _
    $region19: #{_forward_impl.1} parent=1 // pred_check_branch
      %93 = sbr.rel (0) target = $region21
    $region20: #{_forward_impl.1} parent=1 // pred_region
      %s95 = ssub.s32 128, 128
      %96 = vsyncadd [#allocation4], %s95
      %s98 = sshll.u32 [#allocation3], 4
      %s99 = int_to_ptr.vmem [resolvable:$true] %s98
      %101 = dma.vmem_to_hbm [thread:$0]  %s99, 128, %s2, [#allocation4]
    $region21: #{_forward_impl.1} parent=1 // pred_fallthru
      _
    // Predicated region
    $region22: #{_forward_impl.1} parent=1 // pred_check
      _
    $region23: #{_forward_impl.1} parent=1 // pred_check_branch
      %103 = sbr.rel (0) target = $region25
    $region24: #{_forward_impl.1} parent=1 // pred_region
      %104 = dma.done [#allocation4], 128
    $region25: #{_forward_impl.1} parent=1 // pred_fallthru
      _
    %105 = vsyncpa [#allocation4], 1

</llo_original>
